<compile_context>
chip_gen: v7x
topology: tpu7x:2x2x1
jax: 0.10.0
libtpu: 0.0.40
codegen_flags: <defaults>
</compile_context>

<pallas_src>
import jax
import jax.numpy as jnp
from jax.experimental import pallas as pl
from jax.experimental.pallas import tpu as pltpu


def _attention_kernel(x_ref, w_ref, b_ref, xatt_ref, attw_ref):
    # x_ref:    (TB, S, E)  VMEM
    # w_ref:    (1, E)      VMEM   (query weight row; Linear does X @ W^T)
    # b_ref:    (1,)        SMEM   (query bias scalar)
    # xatt_ref: (TB, E)     VMEM output
    # attw_ref: (TB, S)     VMEM output
    w = w_ref[...].astype(jnp.float32)                        # (1, E)
    b = b_ref[0]                                              # scalar

    # Attention scores tanh(X @ w + b) as a lane-axis (E) reduction.  x_ref is
    # indexed (and cast) here directly so cast+mul+reduce fuse per vreg -- no
    # slab-sized f32 temp shared with the pool below.
    scores = jnp.tanh(
        jnp.sum(x_ref[...].astype(jnp.float32) * w, axis=-1) + b)   # (TB, S)

    # Softmax over the sequence axis.  tanh bounds scores to [-1, 1], so the
    # max-subtraction is unnecessary.
    p = jnp.exp(scores)                                       # (TB, S)
    denom = jnp.sum(p, axis=-1, keepdims=True)                # (TB, 1)
    # Reciprocal on the EUP slot; one Newton step on the tiny (TB, 1) array
    # restores full f32 accuracy at negligible cost.
    inv = pl.reciprocal(denom, approx=True)
    inv = inv * (2.0 - denom * inv)
    att = p * inv                                             # (TB, S)
    attw_ref[...] = att.astype(attw_ref.dtype)                # dense (TB, S) store

    # Weighted pool on the MXU: batched contraction over S (batch = TB).
    # att is cast to x's dtype (bf16 inputs stay bf16 on the MXU); accumulation
    # is f32 via preferred_element_type.
    pooled = jnp.einsum(
        "bqs,bse->bqe",
        att[:, None, :].astype(x_ref.dtype),                  # (TB, 1, S)
        x_ref[...],                                           # (TB, S, E)
        preferred_element_type=jnp.float32,
    )                                                         # (TB, 1, E)
    xatt_ref[...] = pooled[:, 0, :].astype(xatt_ref.dtype)    # dense (TB, E) store


def _round_up(x, m):
    return ((x + m - 1) // m) * m


def _round_down(x, m):
    return (x // m) * m


def _chip_defaults():
    """Per-generation budgets: (vmem_footprint_budget, vmem_limit_bytes, two_cores)."""
    vmem_cap = None
    try:
        vmem_cap = getattr(pltpu.get_tpu_info(), "vmem_capacity_bytes", None)
    except Exception:  # pragma: no cover - non-TPU / query unsupported
        vmem_cap = None
    mib = 1024 * 1024
    if vmem_cap is not None and vmem_cap <= 64 * mib:
        # v7x-class: 64 MiB VMEM per TensorCore, 2 TensorCores per chip.
        return 36 * mib, 48 * mib, True
    if vmem_cap is not None:
        # v5e / v6e: 128 MiB physical VMEM, single TensorCore.
        return 64 * mib, 96 * mib, False
    # Unknown backend: conservative (v7x-safe) numbers.
    return 24 * mib, 48 * mib, False


def _pick_block_b(B, S, E, itemsize, footprint_budget, two_cores):
    # Per-batch-row VMEM footprint: double-buffered input slab + f32 score-path
    # intermediates + double-buffered (S + E) outputs.
    per_batch = S * E * (2 * itemsize + 4) + 2 * (S + E) * 4
    tb = max(1, footprint_budget // per_batch)
    if tb >= B:
        # Whole batch fits in one slab.
        if two_cores and B >= 16:
            # v7x only: force two grid steps so both TensorCores get work
            # ("parallel" axis).  Keep tb a multiple of 8.
            return _round_up(pl.cdiv(B, 2), 8)
        # v5e/v6e (single TC): one big slab, no extra per-step overhead.
        return B
    # Multiple grid steps: tb is the sublane dim of the output BlockSpecs, keep
    # it a multiple of 8 to avoid masked sublane stores.
    tb = max(8, _round_down(tb, 8))
    return min(tb, B)


def my_attention(X, w_q, b_q, *, block_b=None):
    """X: (B, S, E); w_q: (1, E) (PyTorch Linear weight); b_q: (1,) bias.

    Returns (X_att: (B, E), att_weight: (B, S)) in X.dtype (matching PyTorch,
    where softmax of a bf16 input is bf16).  Internal math accumulates in f32.
    """
    B, S, E = X.shape
    w_row = jnp.asarray(w_q, jnp.float32).reshape(1, E)
    b_vec = jnp.asarray(b_q, jnp.float32).reshape(1)

    footprint_budget, vmem_limit, two_cores = _chip_defaults()
    if block_b is None:
        tb = _pick_block_b(B, S, E, X.dtype.itemsize, footprint_budget, two_cores)
    else:
        tb = min(block_b, B)
        if tb < B:
            tb = min(max(8, _round_down(tb, 8)), B)

    grid = (pl.cdiv(B, tb),)

    out_shapes = (
        jax.ShapeDtypeStruct((B, E), X.dtype),  # X_att
        jax.ShapeDtypeStruct((B, S), X.dtype),  # att_weight (squeezed)
    )

    grid_spec = pltpu.PrefetchScalarGridSpec(
        num_scalar_prefetch=0,
        grid=grid,
        in_specs=[
            pl.BlockSpec((tb, S, E), lambda i: (i, 0, 0)),           # X slab
            pl.BlockSpec((1, E), lambda i: (0, 0)),                  # weight row (shared)
            pl.BlockSpec(memory_space=pltpu.MemorySpace.SMEM),       # bias scalar
        ],
        out_specs=[
            pl.BlockSpec((tb, E), lambda i: (i, 0)),
            pl.BlockSpec((tb, S), lambda i: (i, 0)),
        ],
    )

    return pl.pallas_call(
        _attention_kernel,
        out_shape=out_shapes,
        grid_spec=grid_spec,
        compiler_params=pltpu.CompilerParams(
            dimension_semantics=("parallel",),
            vmem_limit_bytes=vmem_limit,
        ),
    )(X, w_row, b_vec)


def _xavier_uniform(key, shape, gain):
    # nn.init.xavier_uniform_ for a Linear weight of shape (out, in)
    fan_out, fan_in = shape
    limit = gain * jnp.sqrt(6.0 / (fan_in + fan_out))
    return jax.random.uniform(key, shape, jnp.float32, -limit, limit)


if __name__ == "__main__":
    B, S, E = 2, 8, 32   # batch, sequence length, embedding_size

    key = jax.random.PRNGKey(0)
    k_x, k_w, k_b = jax.random.split(key, 3)

    X = jax.random.normal(k_x, (B, S, E), dtype=jnp.float32)

    # Deterministic parameter init mirroring __init__:
    # query = nn.Linear(E, 1); xavier_uniform_(weight, gain=calculate_gain('tanh')=5/3)
    gain_tanh = 5.0 / 3.0
    w_q = _xavier_uniform(k_w, (1, E), gain_tanh)            # (out=1, in=E)
    bound = 1.0 / jnp.sqrt(E)                                # default Linear bias init
    b_q = jax.random.uniform(k_b, (1,), jnp.float32, -bound, bound)

    X_att, att_weight = my_attention(X, w_q, b_q)
    jax.block_until_ready((X_att, att_weight))

    # Reference check in plain JAX (same math as the PyTorch forward).
    scores_ref = jnp.tanh(jnp.einsum("bse,e->bs", X, w_q[0]) + b_q[0])   # (B, S)
    attw_ref = jax.nn.softmax(scores_ref, axis=1)                        # (B, S)
    xatt_ref = jnp.einsum("bse,bs->be", X, attw_ref)                     # (B, E)

    assert X_att.shape == (B, E) and att_weight.shape == (B, S)
    # att_weight is a pure VPU/EUP path (NR-refined reciprocal): tight check.
    assert jnp.allclose(att_weight, attw_ref, atol=1e-4, rtol=1e-4)
    # X_att goes through the MXU; default TPU matmul precision truncates f32
    # operands toward bf16, so allow bf16-level error on the pooled output.
    assert jnp.allclose(X_att, xatt_ref, atol=5e-3, rtol=5e-3)

    # bf16 input path (halves HBM traffic for this bandwidth-bound op).
    X_bf16 = X.astype(jnp.bfloat16)
    X_att_b, att_w_b = my_attention(X_bf16, w_q, b_q)
    jax.block_until_ready((X_att_b, att_w_b))
    assert jnp.allclose(X_att_b.astype(jnp.float32), xatt_ref, atol=5e-2, rtol=5e-2)

    print("KERNEL_OK")
</pallas_src>

<mosaic_0001>
module attributes {stable_mosaic.version = 11 : i64} {
  func.func @_attention_kernel(%arg0: i32, %arg1: memref<2x8x32xf32, #tpu.memory_space<vmem>>, %arg2: memref<1x32xf32, #tpu.memory_space<vmem>>, %arg3: memref<1xf32, #tpu.memory_space<smem>>, %arg4: memref<2x32xf32, #tpu.memory_space<vmem>>, %arg5: memref<2x8xf32, #tpu.memory_space<vmem>>) attributes {dimension_semantics = [#tpu.dimension_semantics<parallel>], iteration_bounds = array<i64: 1>, scalar_prefetch = 0 : i64, scratch_operands = 0 : i64, tpu.core_type = #tpu.core_type<tc>, window_params = [{transform_indices = @transform_0, window_bounds = array<i64: 2, 8, 32>}, {pipeline_mode = #tpu.pipeline_mode<synchronous>, transform_indices = @transform_1, window_bounds = array<i64: 1, 32>}, {transform_indices = @transform_2, window_bounds = array<i64: 1>}, {transform_indices = @transform_3, window_bounds = array<i64: 2, 32>}, {transform_indices = @transform_4, window_bounds = array<i64: 2, 8>}]} {
    %c0 = arith.constant 0 : index
    %c0_0 = arith.constant 0 : index
    %0 = vector.load %arg2[%c0, %c0_0] : memref<1x32xf32, #tpu.memory_space<vmem>>, vector<1x32xf32>
    %c0_1 = arith.constant 0 : index
    %1 = memref.load %arg3[%c0_1] : memref<1xf32, #tpu.memory_space<smem>>
    %c0_2 = arith.constant 0 : index
    %c0_3 = arith.constant 0 : index
    %c0_4 = arith.constant 0 : index
    %2 = vector.load %arg1[%c0_2, %c0_3, %c0_4] : memref<2x8x32xf32, #tpu.memory_space<vmem>>, vector<2x8x32xf32>
    %3 = vector.shape_cast %0 : vector<1x32xf32> to vector<1x1x32xf32>
    %4 = vector.broadcast %3 : vector<1x1x32xf32> to vector<2x8x32xf32>
    %5 = arith.mulf %2, %4 : vector<2x8x32xf32>
    %cst = arith.constant dense<0.000000e+00> : vector<2x8xf32>
    %6 = vector.multi_reduction <add>, %5, %cst [2] : vector<2x8x32xf32> to vector<2x8xf32>
    %7 = vector.broadcast %1 : f32 to vector<2x8xf32>
    %8 = arith.addf %6, %7 : vector<2x8xf32>
    %9 = math.tanh %8 : vector<2x8xf32>
    %10 = math.exp %9 : vector<2x8xf32>
    %cst_5 = arith.constant dense<0.000000e+00> : vector<2xf32>
    %11 = vector.multi_reduction <add>, %10, %cst_5 [1] : vector<2x8xf32> to vector<2xf32>
    %12 = vector.shape_cast %11 : vector<2xf32> to vector<2x1xf32>
    %13 = tpu.reciprocal %12 {approx = true} : vector<2x1xf32> -> vector<2x1xf32>
    %14 = arith.mulf %12, %13 : vector<2x1xf32>
    %cst_6 = arith.constant 2.000000e+00 : f32
    %15 = vector.broadcast %cst_6 : f32 to vector<2x1xf32>
    %16 = arith.subf %15, %14 : vector<2x1xf32>
    %17 = arith.mulf %13, %16 : vector<2x1xf32>
    %18 = vector.broadcast %17 : vector<2x1xf32> to vector<2x8xf32>
    %19 = arith.mulf %10, %18 : vector<2x8xf32>
    %c0_7 = arith.constant 0 : index
    %c0_8 = arith.constant 0 : index
    %20 = vector.load %arg5[%c0_7, %c0_8] : memref<2x8xf32, #tpu.memory_space<vmem>>, vector<2x8xf32>
    tpu.vector_store %arg5[%c0_7, %c0_8], %19 {strides = array<i32>} : memref<2x8xf32, #tpu.memory_space<vmem>>, vector<2x8xf32>,
    %21 = vector.shape_cast %19 : vector<2x8xf32> to vector<2x1x8xf32>
    %c0_9 = arith.constant 0 : index
    %c0_10 = arith.constant 0 : index
    %c0_11 = arith.constant 0 : index
    %22 = vector.load %arg1[%c0_9, %c0_10, %c0_11] : memref<2x8x32xf32, #tpu.memory_space<vmem>>, vector<2x8x32xf32>
    "tpu.trace_start"() <{level = 10 : i32, message = "bqs,bse->bqe"}> : () -> ()
    %cst_12 = arith.constant dense<0.000000e+00> : vector<2x1x32xf32>
    %23 = tpu.matmul %21, %22, %cst_12 {dimension_numbers = #tpu.dot_dimension_numbers<[2], [1], [1], [2], [0, 0, 0, 1, 1, 2], [0], [0]>} : vector<2x1x8xf32>, vector<2x8x32xf32>, vector<2x1x32xf32> -> vector<2x1x32xf32>
    "tpu.trace_stop"() : () -> ()
    %24 = vector.shape_cast %23 : vector<2x1x32xf32> to vector<2x32xf32>
    %c0_13 = arith.constant 0 : index
    %c0_14 = arith.constant 0 : index
    %25 = vector.load %arg4[%c0_13, %c0_14] : memref<2x32xf32, #tpu.memory_space<vmem>>, vector<2x32xf32>
    tpu.vector_store %arg4[%c0_13, %c0_14], %24 {strides = array<i32>} : memref<2x32xf32, #tpu.memory_space<vmem>>, vector<2x32xf32>,
    return
  }
  func.func @transform_0(%arg0: i32) -> (i32, i32, i32) {
    %c0_i32 = arith.constant 0 : i32
    %c0_i32_0 = arith.constant 0 : i32
    %c0_i32_1 = arith.constant 0 : i32
    return %arg0, %c0_i32, %c0_i32_0 : i32, i32, i32
  }
  func.func @transform_1(%arg0: i32) -> (i32, i32) {
    %c0_i32 = arith.constant 0 : i32
    %c0_i32_0 = arith.constant 0 : i32
    %c0_i32_1 = arith.constant 0 : i32
    return %c0_i32, %c0_i32_0 : i32, i32
  }
  func.func @transform_2(%arg0: i32) -> i32 {
    %c0_i32 = arith.constant 0 : i32
    %c0_i32_0 = arith.constant 0 : i32
    return %c0_i32 : i32
  }
  func.func @transform_3(%arg0: i32) -> (i32, i32) {
    %c0_i32 = arith.constant 0 : i32
    %c0_i32_0 = arith.constant 0 : i32
    return %arg0, %c0_i32 : i32, i32
  }
  func.func @transform_4(%arg0: i32) -> (i32, i32) {
    %c0_i32 = arith.constant 0 : i32
    %c0_i32_0 = arith.constant 0 : i32
    return %arg0, %c0_i32 : i32, i32
  }
}

</mosaic_0001>

<llo_original>
// kernel: tpu_custom_call.1
$region0: #{tpu_custom_call.1}
  #allocation0 [shape = 'u32[]', space=smem, size = 0x4, offset = 0x4, fixed_abs, tag = 'smem constant byte address 0x4 - core index']
  #allocation1 [shape = 'u32[144,128]{1,0:T(1,128)}', space=vmem, size = 0x12000, scoped, tag = 'internal scratch']
  #allocation2 [shape = 'f32[1]{0:T(128)S(6)}', space=smem, size = 0x200, scoped, tag = 'scoped memory for tpu_custom_call.1']
  %s0 = inlined_call_operand.hbm [shape: f32[2,8,32], index: 0, kind: input, shape index: {}]
  %s1 = inlined_call_operand.vmem [shape: f32[1,32], index: 1, kind: input, shape index: {}]
  %s2 = inlined_call_operand.<no memory space> [shape: f32[1], index: 2, kind: input, shape index: {}]
  %s3 = inlined_call_operand.hbm [shape: f32[2,32], index: 3, kind: output, shape index: {0}]
  %s4 = inlined_call_operand.hbm [shape: f32[2,8], index: 4, kind: output, shape index: {1}]
  %5 = xla_tuple %s3, %s4
  %s6 = sld [smem:[#allocation0]]
  $region34: #{tpu_custom_call.1} parent=0
    _
  %s8 = ssub.s32 1, %s6
  %s9 = scalar_select 0, %s8, %s6
  %10 = sst [smem:[#allocation2]] %s2
  $region1: #{tpu_custom_call.1} parent=0
    #allocation3 [shape = 'u8[8192]{0}', space=vmem, size = 0x2000, scoped, tag = 'input window, operand 0, single buffered']
    #allocation4 [shape = 's32[1]{0}', space=sflag, size = 0x4, scoped, tag = 'scoped memory for tpu_custom_call.1']
    #allocation5 [shape = 's32[1]{0}', space=sflag, size = 0x4, scoped, tag = 'scoped memory for tpu_custom_call.1']
    #allocation6 [shape = 'u8[1024]{0}', space=vmem, size = 0x400, scoped, tag = 'output window, operand 0, single buffered']
    #allocation7 [shape = 'u8[1024]{0}', space=vmem, size = 0x400, scoped, tag = 'output window, operand 1, single buffered']
    #allocation8 [shape = 's32[1]{0}', space=sflag, size = 0x4, scoped, tag = 'scoped memory for tpu_custom_call.1']
    %11 = vsyncpa [#allocation4], 0
    %12 = vsyncpa [#allocation5], 0
    %13 = vsyncpa [#allocation8], 0
    // Predicated region
    $region2: #{tpu_custom_call.1} parent=1 // pred_check
      _
    $region3: #{tpu_custom_call.1} parent=1 // pred_check_branch
      %15 = sbr.rel (0) target = $region5
    $region4: #{tpu_custom_call.1} parent=1 // pred_region
      %s17 = ssub.s32 256, 256
      %18 = vsyncadd [#allocation4], %s17
      %s19 = sshll.u32 [#allocation3], 4
      %s20 = int_to_ptr.vmem [resolvable:$true] %s19
      %25 = dma.hbm_to_vmem [thread:$0]  %s0, 256, %s20, [#allocation4], 128, 128, 8
    $region5: #{tpu_custom_call.1} parent=1 // pred_fallthru
      _
    // Predicated region
    $region6: #{tpu_custom_call.1} parent=1 // pred_check
      _
    $region7: #{tpu_custom_call.1} parent=1 // pred_check_branch
      %27 = sbr.rel (0) target = $region9
    $region8: #{tpu_custom_call.1} parent=1 // pred_region
      _
    $region9: #{tpu_custom_call.1} parent=1 // pred_fallthru
      _
    // Predicated region
    $region10: #{tpu_custom_call.1} parent=1 // pred_check
      _
    $region11: #{tpu_custom_call.1} parent=1 // pred_check_branch
      %29 = sbr.rel (0) target = $region13
    $region12: #{tpu_custom_call.1} parent=1 // pred_region
      _
    $region13: #{tpu_custom_call.1} parent=1 // pred_fallthru
      _
    // Predicated region
    $region14: #{tpu_custom_call.1} parent=1 // pred_check
      _
    $region15: #{tpu_custom_call.1} parent=1 // pred_check_branch
      %31 = sbr.rel (0) target = $region17
    $region16: #{tpu_custom_call.1} parent=1 // pred_region
      %32 = dma.done [#allocation4], 256
    $region17: #{tpu_custom_call.1} parent=1 // pred_fallthru
      _
    %v33 = vld [vmem:[%s1] sm:$0x1]
    %s34 = sld [smem:[#allocation2]]
    %v35 = vld [vmem:[#allocation3] sm:$0xff]
    %v36 = vld [vmem:[#allocation3 + $0x8] sm:$0xff]
    %v38 = vlaneseq
    %v39 = vshrl.u32 %v38, 7
    %v40 = vsub.s32 0, %v39
    %v41 = vrot.slane %v33, %v40
    %v43 = vmul.f32 %v35, %v41
    %v44 = vmul.f32 %v36, %v41
    %vm45 = vcmask 261120
    %v46 = vsel %vm45, %v43, 0.0
    %47 = vadd.xlane.f32.xlu0 %v46
    %v48 = vpop.xlane.xlu0 %47
    %v49 = vsel %vm45, %v44, 0.0
    %50 = vadd.xlane.f32.xlu0 %v49
    %v51 = vpop.xlane.xlu0 %50
    %v52 = vstv %s34
    %v53 = vadd.f32 %v48, %v52
    %v54 = vadd.f32 %v51, %v52
    %v55 = vtanh.pop %v53
    %v56 = vtanh.pop %v54
    %v57 = vmul.f32 %v55, 1.442695
    %v58 = vpow.pop %v57
    %v59 = vmul.f32 %v56, 1.442695
    %v60 = vpow.pop %v59
    %v63 = vlaneseq
    %v64 = vand.u32 %v63, 127
    %v65 = vlaneseq
    %v66 = vshrl.u32 %v65, 7
    %v67 = vsub.s32 %v64, %v66
    %v68 = vrot.slane %v58, %v67
    %v69 = vlaneseq
    %v70 = vshrl.u32 %v69, 7
    %v71 = vsub.s32 %v64, %v70
    %v72 = vrot.slane %v60, %v71
    %vm73 = vcmask 1041409
    %v74 = vsel %vm73, %v72, %v68
    %vm76 = vcmask 58368
    %v77 = vsel %vm76, %v74, 0.0
    %78 = vadd.xlane.f32.xlu0 %v77
    %v79 = vpop.xlane.xlu0 %78
    %v80 = vrcp.pop %v79
    %v81 = vmul.f32 %v79, %v80
    %v82 = vsub.f32 2.0, %v81
    %v83 = vmul.f32 %v80, %v82
    %v85 = vlaneseq
    %v86 = vshrl.u32 %v85, 7
    %v87 = vsub.s32 0, %v86
    %v88 = vrot.slane %v83, %v87
    %v89 = vlaneseq
    %v90 = vshrl.u32 %v89, 7
    %v91 = vsub.s32 1, %v90
    %v92 = vrot.slane %v83, %v91
    %v95 = vmul.f32 %v58, %v88
    %v96 = vmul.f32 %v60, %v92
    %99 = vset.pattern.permute.xlu0 0
    %100 = vperm.xlu0 %99, %v95
    %v101 = vpop.permute.xlu0 %100
    %102 = vset.pattern.permute.xlu0 0
    %103 = vperm.xlu0 %102, %v96
    %v104 = vpop.permute.xlu0 %103
    %v105 = vlaneseq
    %v106 = vshrl.u32 %v105, 7
    %v107 = vsub.s32 %v64, %v106
    %v108 = vrot.slane %v101, %v107
    %v109 = vlaneseq
    %v110 = vshrl.u32 %v109, 7
    %v111 = vsub.s32 %v64, %v110
    %v112 = vrot.slane %v104, %v111
    %v113 = vsel %vm73, %v112, %v108
    %115 = vst.msk [vmem:[#allocation7] sm:$0x3] %vm76, %v113
    %v116 = vld [vmem:[#allocation3] sm:$0xff]
    %v117 = vld [vmem:[#allocation3 + $0x8] sm:$0xff]
    %vm118 = vcmask 64512
    %v119 = vsel %vm118, %v108, 0
    %121 = vmatprep.subr.mxu0 0.0
    %122 = vmatpush1.msra.mxu0 %v116
    %123 = vmatprep.subr.mxu0 0.0
    %124 = vmatpush1.msra.mxu0 0.0
    %125 = vmatprep.subr.mxu0 0.0
    %126 = vmatpush1.msra.mxu0 0.0
    %127 = vmatprep.subr.mxu0 0.0
    %128 = vmatpush1.msra.mxu0 0.0
    %129 = vmatprep.subr.mxu0 0.0
    %130 = vmatpush1.msra.mxu0 0.0
    %131 = vmatprep.subr.mxu0 0.0
    %132 = vmatpush1.msra.mxu0 0.0
    %133 = vmatprep.subr.mxu0 0.0
    %134 = vmatpush1.msra.mxu0 0.0
    %135 = vmatprep.subr.mxu0 0.0
    %136 = vmatpush1.msra.mxu0 0.0
    %137 = vmatprep.subr.mxu0 0.0
    %138 = vmatpush1.msra.mxu0 0.0
    %139 = vmatprep.subr.mxu0 0.0
    %140 = vmatpush1.msra.mxu0 0.0
    %141 = vmatprep.subr.mxu0 0.0
    %142 = vmatpush1.msra.mxu0 0.0
    %143 = vmatprep.subr.mxu0 0.0
    %144 = vmatpush1.msra.mxu0 0.0
    %145 = vmatprep.subr.mxu0 0.0
    %146 = vmatpush1.msra.mxu0 0.0
    %147 = vmatprep.subr.mxu0 0.0
    %148 = vmatpush1.msra.mxu0 0.0
    %149 = vmatprep.subr.mxu0 0.0
    %150 = vmatpush1.msra.mxu0 0.0
    %151 = vmatprep.subr.mxu0 0.0
    %152 = vmatpush1.msra.mxu0 0.0
    %153 = vmatprep.subr.mxu0 0.0
    %154 = vmatpush1.msra.mxu0 0.0
    %155 = vmatprep.subr.mxu0 0.0
    %156 = vmatpush1.msra.mxu0 0.0
    %157 = vmatprep.subr.mxu0 0.0
    %158 = vmatpush1.msra.mxu0 0.0
    %159 = vmatprep.subr.mxu0 0.0
    %160 = vmatpush1.msra.mxu0 0.0
    %161 = vmatprep.subr.mxu0 0.0
    %162 = vmatpush1.msra.mxu0 0.0
    %163 = vmatprep.subr.mxu0 0.0
    %164 = vmatpush1.msra.mxu0 0.0
    %165 = vmatprep.subr.mxu0 0.0
    %166 = vmatpush1.msra.mxu0 0.0
    %167 = vmatprep.subr.mxu0 0.0
    %168 = vmatpush1.msra.mxu0 0.0
    %169 = vmatprep.subr.mxu0 0.0
    %170 = vmatpush1.msra.mxu0 0.0
    %171 = vmatprep.subr.mxu0 0.0
    %172 = vmatpush1.msra.mxu0 0.0
    %173 = vmatprep.subr.mxu0 0.0
    %174 = vmatpush1.msra.mxu0 0.0
    %175 = vmatprep.subr.mxu0 0.0
    %176 = vmatpush1.msra.mxu0 0.0
    %177 = vmatprep.subr.mxu0 0.0
    %178 = vmatpush1.msra.mxu0 0.0
    %179 = vmatprep.subr.mxu0 0.0
    %180 = vmatpush1.msra.mxu0 0.0
    %181 = vmatprep.subr.mxu0 0.0
    %182 = vmatpush1.msra.mxu0 0.0
    %183 = vmatprep.subr.mxu0 0.0
    %184 = vmatpush1.msra.mxu0 0.0
    %185 = vmatprep.mubr.f32.mxu0 0.0
    %186 = vmatmul.mubr.f32.gmra.mrb[0].mxu0 %v119
    %v187 = vpop.f32.mrb[0].mxu0
    %v188 = vadd.f32 0.0, %v187
    %v189 = vpop.f32.mrb[0].mxu0
    %190 = vdwg.mxu0
    %v191 = vsel %vm118, %v112, 0
    %193 = vmatprep.subr.mxu0 0.0
    %194 = vmatpush1.msra.mxu0 %v117
    %195 = vmatprep.subr.mxu0 0.0
    %196 = vmatpush1.msra.mxu0 0.0
    %197 = vmatprep.subr.mxu0 0.0
    %198 = vmatpush1.msra.mxu0 0.0
    %199 = vmatprep.subr.mxu0 0.0
    %200 = vmatpush1.msra.mxu0 0.0
    %201 = vmatprep.subr.mxu0 0.0
    %202 = vmatpush1.msra.mxu0 0.0
    %203 = vmatprep.subr.mxu0 0.0
    %204 = vmatpush1.msra.mxu0 0.0
    %205 = vmatprep.subr.mxu0 0.0
    %206 = vmatpush1.msra.mxu0 0.0
    %207 = vmatprep.subr.mxu0 0.0
    %208 = vmatpush1.msra.mxu0 0.0
    %209 = vmatprep.subr.mxu0 0.0
    %210 = vmatpush1.msra.mxu0 0.0
    %211 = vmatprep.subr.mxu0 0.0
    %212 = vmatpush1.msra.mxu0 0.0
    %213 = vmatprep.subr.mxu0 0.0
    %214 = vmatpush1.msra.mxu0 0.0
    %215 = vmatprep.subr.mxu0 0.0
    %216 = vmatpush1.msra.mxu0 0.0
    %217 = vmatprep.subr.mxu0 0.0
    %218 = vmatpush1.msra.mxu0 0.0
    %219 = vmatprep.subr.mxu0 0.0
    %220 = vmatpush1.msra.mxu0 0.0
    %221 = vmatprep.subr.mxu0 0.0
    %222 = vmatpush1.msra.mxu0 0.0
    %223 = vmatprep.subr.mxu0 0.0
    %224 = vmatpush1.msra.mxu0 0.0
    %225 = vmatprep.subr.mxu0 0.0
    %226 = vmatpush1.msra.mxu0 0.0
    %227 = vmatprep.subr.mxu0 0.0
    %228 = vmatpush1.msra.mxu0 0.0
    %229 = vmatprep.subr.mxu0 0.0
    %230 = vmatpush1.msra.mxu0 0.0
    %231 = vmatprep.subr.mxu0 0.0
    %232 = vmatpush1.msra.mxu0 0.0
    %233 = vmatprep.subr.mxu0 0.0
    %234 = vmatpush1.msra.mxu0 0.0
    %235 = vmatprep.subr.mxu0 0.0
    %236 = vmatpush1.msra.mxu0 0.0
    %237 = vmatprep.subr.mxu0 0.0
    %238 = vmatpush1.msra.mxu0 0.0
    %239 = vmatprep.subr.mxu0 0.0
    %240 = vmatpush1.msra.mxu0 0.0
    %241 = vmatprep.subr.mxu0 0.0
    %242 = vmatpush1.msra.mxu0 0.0
    %243 = vmatprep.subr.mxu0 0.0
    %244 = vmatpush1.msra.mxu0 0.0
    %245 = vmatprep.subr.mxu0 0.0
    %246 = vmatpush1.msra.mxu0 0.0
    %247 = vmatprep.subr.mxu0 0.0
    %248 = vmatpush1.msra.mxu0 0.0
    %249 = vmatprep.subr.mxu0 0.0
    %250 = vmatpush1.msra.mxu0 0.0
    %251 = vmatprep.subr.mxu0 0.0
    %252 = vmatpush1.msra.mxu0 0.0
    %253 = vmatprep.subr.mxu0 0.0
    %254 = vmatpush1.msra.mxu0 0.0
    %255 = vmatprep.subr.mxu0 0.0
    %256 = vmatpush1.msra.mxu0 0.0
    %257 = vmatprep.mubr.f32.mxu0 0.0
    %258 = vmatmul.mubr.f32.gmra.mrb[0].mxu0 %v191
    %v259 = vpop.f32.mrb[0].mxu0
    %v260 = vadd.f32 0.0, %v259
    %v261 = vpop.f32.mrb[0].mxu0
    %262 = vdwg.mxu0
    %v265 = vrot.slane %v260, 7
    %v266 = vsel %vm73, %v265, %v188
    %vm268 = vcmask 254976
    %269 = vst.msk [vmem:[#allocation6] sm:$0x3] %vm268, %v266
    // Predicated region
    $region18: #{tpu_custom_call.1} parent=1 // pred_check
      _
    $region19: #{tpu_custom_call.1} parent=1 // pred_check_branch
      %271 = sbr.rel (0) target = $region21
    $region20: #{tpu_custom_call.1} parent=1 // pred_region
      %s273 = ssub.s32 32, 32
      %274 = vsyncadd [#allocation5], %s273
      %s276 = sshll.u32 [#allocation6], 4
      %s277 = int_to_ptr.vmem [resolvable:$true] %s276
      %279 = dma.vmem_to_hbm [thread:$0]  %s277, 32, %s3, [#allocation5]
    $region21: #{tpu_custom_call.1} parent=1 // pred_fallthru
      _
    // Predicated region
    $region22: #{tpu_custom_call.1} parent=1 // pred_check
      _
    $region23: #{tpu_custom_call.1} parent=1 // pred_check_branch
      %281 = sbr.rel (0) target = $region25
    $region24: #{tpu_custom_call.1} parent=1 // pred_region
      %s283 = ssub.s32 32, 32
      %284 = vsyncadd [#allocation8], %s283
      %s286 = sshll.u32 [#allocation7], 4
      %s287 = int_to_ptr.vmem [resolvable:$true] %s286
      %289 = dma.vmem_to_hbm [thread:$0]  %s287, 32, %s4, [#allocation8]
    $region25: #{tpu_custom_call.1} parent=1 // pred_fallthru
      _
    // Predicated region
    $region26: #{tpu_custom_call.1} parent=1 // pred_check
      _
    $region27: #{tpu_custom_call.1} parent=1 // pred_check_branch
      %291 = sbr.rel (0) target = $region29
    $region28: #{tpu_custom_call.1} parent=1 // pred_region
      %292 = dma.done [#allocation5], 32
    $region29: #{tpu_custom_call.1} parent=1 // pred_fallthru
      _
    // Predicated region
    $region30: #{tpu_custom_call.1} parent=1 // pred_check
      _
    $region31: #{tpu_custom_call.1} parent=1 // pred_check_branch
      %294 = sbr.rel (0) target = $region33
    $region32: #{tpu_custom_call.1} parent=1 // pred_region
      %295 = dma.done [#allocation8], 32
    $region33: #{tpu_custom_call.1} parent=1 // pred_fallthru
      _
    %296 = vsyncpa [#allocation4], 1
    %297 = vsyncpa [#allocation5], 1
    %298 = vsyncpa [#allocation8], 1

</llo_original>
